<compile_context>
chip_gen: v7x
topology: tpu7x:2x2x1
jax: 0.10.0
libtpu: 0.0.40
codegen_flags: <defaults>
</compile_context>

<pallas_src>
import math

import jax
import jax.numpy as jnp
from jax.experimental import pallas as pl
from jax.experimental.pallas import tpu as pltpu


def _make_genrelation_kernel(n_mlp_layers):
    """Fused kernel for a fixed (static) number of MLP layers."""

    def kernel(*refs):
        et_ref, ein_ref = refs[0], refs[1]
        w_refs = refs[2:-1]
        o_ref = refs[-1]

        # TODO(synk): MLP class body is not shown in the spec; assumed
        # Linear + ReLU for every layer of the channel sequence.
        h = et_ref[...]
        k = 0
        for _ in range(n_mlp_layers):
            w = w_refs[k][...]          # param dtype (bf16 hits native MXU path)
            b = w_refs[k + 1][...]      # f32 bias
            h = jnp.maximum(
                jnp.dot(h.astype(w.dtype), w,
                        preferred_element_type=jnp.float32) + b, 0.0)
            k += 2

        wb = w_refs[k][...]
        bb = w_refs[k + 1][...]
        wc = w_refs[k + 2][...]
        bc = w_refs[k + 3][...]

        zb = jnp.dot(h.astype(wb.dtype), wb,
                     preferred_element_type=jnp.float32) + bb
        zc = jnp.dot(h.astype(wc.dtype), wc,
                     preferred_element_type=jnp.float32) + bc

        # sigmoid(x) == 0.5 * tanh(0.5 * x) + 0.5  (EUP-friendly, no divide)
        scale = 0.5 * jnp.tanh(0.5 * zb) + 0.5

        out = scale * ein_ref[...].astype(jnp.float32) + zc
        o_ref[...] = out.astype(o_ref.dtype)

    return kernel


def _round_up(x, m):
    return ((x + m - 1) // m) * m


def _choose_fold(rows, edge_dim, target_lanes=256):
    """Largest fold factor <= target_lanes/edge_dim that divides `rows`."""
    desired = max(1, target_lanes // edge_dim)
    for cand in (32, 16, 8, 4, 2):
        if cand <= desired and rows % cand == 0:
            return cand
    return 1


def _choose_tile_rows(folded_rows, streamed_bytes_per_row,
                      live_budget_bytes=6 * 1024 * 1024):
    """Rows per block from the real (lane-padded, double-buffered) footprint."""
    budget_rows = max(8, live_budget_bytes // (2 * streamed_bytes_per_row))
    # Keep >= ~4 grid steps when there is enough work so both v7x TensorCores
    # get blocks and each core still double-buffers.
    if folded_rows >= 4 * 8:
        budget_rows = min(budget_rows, -(-folded_rows // 4))
    if budget_rows >= folded_rows:
        return folded_rows                      # single full block
    return max(8, (budget_rows // 8) * 8)


def _block_diag(w, f):
    if f == 1:
        return w
    return jnp.kron(jnp.eye(f, dtype=w.dtype), w)


def gen_relation_forward(Ein, Et, mlp_params, wb, bb, wc, bc):
    """Fused GenRelation forward.

    Ein: (..., edge_dim)   Et: (..., in_channel)
    mlp_params: list of (W, b) with W: (cin, cout), b: (cout,)
    wb/bb, wc/bc: Linear B / Linear C parameters (W: (edge_dim, edge_dim)).
    """
    edge_dim = Ein.shape[-1]
    in_ch = Et.shape[-1]
    lead = Ein.shape[:-1]
    rows = int(math.prod(lead))
    dtype = Ein.dtype
    itemsize = jnp.dtype(dtype).itemsize

    # ---- lane-dense fold of the row axis ------------------------------------
    fold = _choose_fold(rows, edge_dim)
    folded_rows = rows // fold
    et_lanes = fold * in_ch
    e_lanes = fold * edge_dim

    etf = Et.reshape(folded_rows, et_lanes)      # row-major reshape, no copy
    einf = Ein.reshape(folded_rows, e_lanes)

    # ---- block-diagonal weights (built once on host, stay resident) ---------
    weights = []
    for (w, b) in mlp_params:
        weights.append(_block_diag(w, fold))
        weights.append(jnp.tile(b, fold).reshape(1, -1).astype(jnp.float32))
    weights.append(_block_diag(wb, fold))
    weights.append(jnp.tile(bb, fold).reshape(1, -1).astype(jnp.float32))
    weights.append(_block_diag(wc, fold))
    weights.append(jnp.tile(bc, fold).reshape(1, -1).astype(jnp.float32))

    # ---- tile sizing from the real VMEM footprint ---------------------------
    streamed_bytes_per_row = (
        _round_up(et_lanes, 128) + 2 * _round_up(e_lanes, 128)) * itemsize
    tile_rows = _choose_tile_rows(folded_rows, streamed_bytes_per_row)
    grid = (pl.cdiv(folded_rows, tile_rows),)    # ragged last block is masked

    weight_specs = [pl.BlockSpec(w.shape, lambda i: (0, 0)) for w in weights]

    outf = pl.pallas_call(
        _make_genrelation_kernel(len(mlp_params)),
        out_shape=jax.ShapeDtypeStruct((folded_rows, e_lanes), dtype),
        grid=grid,
        in_specs=[
            pl.BlockSpec((tile_rows, et_lanes), lambda i: (i, 0)),
            pl.BlockSpec((tile_rows, e_lanes), lambda i: (i, 0)),
        ] + weight_specs,
        out_specs=pl.BlockSpec((tile_rows, e_lanes), lambda i: (i, 0)),
        compiler_params=pltpu.CompilerParams(
            dimension_semantics=("parallel",)),
    )(etf, einf, *weights)

    return outf.reshape(*lead, edge_dim)


def _ref_forward(Ein, Et, mlp_params, wb, bb, wc, bc):
    h = Et
    for (w, b) in mlp_params:
        h = jnp.maximum(h @ w + b, 0.0)
    scale = jax.nn.sigmoid(h @ wb + bb)
    shift = h @ wc + bc
    return scale * Ein + shift


if __name__ == "__main__":
    key = jax.random.PRNGKey(0)
    keys = iter(jax.random.split(key, 16))

    # Small graph-style shapes: batch=2, nodes=8, in_channel=16, edge_dim=32,
    # nb_mlp_layer=2  ->  channel_sequence = (16, 32, 32).
    B, N = 2, 8
    in_channel = 16
    edge_dim = 32
    nb_mlp_layer = 2

    Ein = jax.random.normal(next(keys), (B, N, N, edge_dim), dtype=jnp.float32)
    Et = jax.random.normal(next(keys), (B, N, N, in_channel), dtype=jnp.float32)

    channel_sequence = (in_channel,) + (edge_dim,) * nb_mlp_layer
    mlp_params = []
    for cin, cout in zip(channel_sequence[:-1], channel_sequence[1:]):
        w = jax.random.normal(next(keys), (cin, cout), dtype=jnp.float32)
        w = w * (1.0 / math.sqrt(cin))
        b = jax.random.normal(next(keys), (cout,), dtype=jnp.float32) * 0.1
        mlp_params.append((w, b))

    wb = jax.random.normal(next(keys), (edge_dim, edge_dim), dtype=jnp.float32)
    wb = wb * (1.0 / math.sqrt(edge_dim))
    bb = jax.random.normal(next(keys), (edge_dim,), dtype=jnp.float32) * 0.1
    wc = jax.random.normal(next(keys), (edge_dim, edge_dim), dtype=jnp.float32)
    wc = wc * (1.0 / math.sqrt(edge_dim))
    bc = jax.random.normal(next(keys), (edge_dim,), dtype=jnp.float32) * 0.1

    out = gen_relation_forward(Ein, Et, mlp_params, wb, bb, wc, bc)
    out = jax.block_until_ready(out)

    ref = _ref_forward(Ein, Et, mlp_params, wb, bb, wc, bc)
    assert out.shape == ref.shape and out.dtype == ref.dtype
    assert jnp.allclose(out, ref, rtol=1e-4, atol=1e-4), "mismatch vs reference"

    print("KERNEL_OK")
</pallas_src>

<mosaic_0001>
module attributes {stable_mosaic.version = 11 : i64} {
  func.func @kernel(%arg0: i32, %arg1: memref<16x128xf32, #tpu.memory_space<vmem>>, %arg2: memref<16x256xf32, #tpu.memory_space<vmem>>, %arg3: memref<128x256xf32, #tpu.memory_space<vmem>>, %arg4: memref<1x256xf32, #tpu.memory_space<vmem>>, %arg5: memref<256x256xf32, #tpu.memory_space<vmem>>, %arg6: memref<1x256xf32, #tpu.memory_space<vmem>>, %arg7: memref<256x256xf32, #tpu.memory_space<vmem>>, %arg8: memref<1x256xf32, #tpu.memory_space<vmem>>, %arg9: memref<256x256xf32, #tpu.memory_space<vmem>>, %arg10: memref<1x256xf32, #tpu.memory_space<vmem>>, %arg11: memref<16x256xf32, #tpu.memory_space<vmem>>) attributes {dimension_semantics = [#tpu.dimension_semantics<parallel>], iteration_bounds = array<i64: 1>, scalar_prefetch = 0 : i64, scratch_operands = 0 : i64, tpu.core_type = #tpu.core_type<tc>, window_params = [{transform_indices = @transform_0, window_bounds = array<i64: 16, 128>}, {transform_indices = @transform_1, window_bounds = array<i64: 16, 256>}, {pipeline_mode = #tpu.pipeline_mode<synchronous>, transform_indices = @transform_2, window_bounds = array<i64: 128, 256>}, {pipeline_mode = #tpu.pipeline_mode<synchronous>, transform_indices = @transform_3, window_bounds = array<i64: 1, 256>}, {pipeline_mode = #tpu.pipeline_mode<synchronous>, transform_indices = @transform_4, window_bounds = array<i64: 256, 256>}, {pipeline_mode = #tpu.pipeline_mode<synchronous>, transform_indices = @transform_5, window_bounds = array<i64: 1, 256>}, {pipeline_mode = #tpu.pipeline_mode<synchronous>, transform_indices = @transform_6, window_bounds = array<i64: 256, 256>}, {pipeline_mode = #tpu.pipeline_mode<synchronous>, transform_indices = @transform_7, window_bounds = array<i64: 1, 256>}, {pipeline_mode = #tpu.pipeline_mode<synchronous>, transform_indices = @transform_8, window_bounds = array<i64: 256, 256>}, {pipeline_mode = #tpu.pipeline_mode<synchronous>, transform_indices = @transform_9, window_bounds = array<i64: 1, 256>}, {transform_indices = @transform_10, window_bounds = array<i64: 16, 256>}]} {
    %c0 = arith.constant 0 : index
    %c0_0 = arith.constant 0 : index
    %0 = vector.load %arg1[%c0, %c0_0] : memref<16x128xf32, #tpu.memory_space<vmem>>, vector<16x128xf32>
    %c0_1 = arith.constant 0 : index
    %c0_2 = arith.constant 0 : index
    %1 = vector.load %arg3[%c0_1, %c0_2] : memref<128x256xf32, #tpu.memory_space<vmem>>, vector<128x256xf32>
    %c0_3 = arith.constant 0 : index
    %c0_4 = arith.constant 0 : index
    %2 = vector.load %arg4[%c0_3, %c0_4] : memref<1x256xf32, #tpu.memory_space<vmem>>, vector<1x256xf32>
    %cst = arith.constant dense<0.000000e+00> : vector<16x256xf32>
    %3 = tpu.matmul %0, %1, %cst {dimension_numbers = #tpu.dot_dimension_numbers<[1], [0], [0], [1], [0, 0, 1, 1], [], []>} : vector<16x128xf32>, vector<128x256xf32>, vector<16x256xf32> -> vector<16x256xf32>
    %4 = vector.broadcast %2 : vector<1x256xf32> to vector<16x256xf32>
    %5 = arith.addf %3, %4 : vector<16x256xf32>
    %cst_5 = arith.constant 0.000000e+00 : f32
    %6 = vector.broadcast %cst_5 : f32 to vector<16x256xf32>
    %7 = arith.maximumf %5, %6 : vector<16x256xf32>
    %c0_6 = arith.constant 0 : index
    %c0_7 = arith.constant 0 : index
    %8 = vector.load %arg5[%c0_6, %c0_7] : memref<256x256xf32, #tpu.memory_space<vmem>>, vector<256x256xf32>
    %c0_8 = arith.constant 0 : index
    %c0_9 = arith.constant 0 : index
    %9 = vector.load %arg6[%c0_8, %c0_9] : memref<1x256xf32, #tpu.memory_space<vmem>>, vector<1x256xf32>
    %cst_10 = arith.constant dense<0.000000e+00> : vector<16x256xf32>
    %10 = tpu.matmul %7, %8, %cst_10 {dimension_numbers = #tpu.dot_dimension_numbers<[1], [0], [0], [1], [0, 0, 1, 1], [], []>} : vector<16x256xf32>, vector<256x256xf32>, vector<16x256xf32> -> vector<16x256xf32>
    %11 = vector.broadcast %9 : vector<1x256xf32> to vector<16x256xf32>
    %12 = arith.addf %10, %11 : vector<16x256xf32>
    %cst_11 = arith.constant 0.000000e+00 : f32
    %13 = vector.broadcast %cst_11 : f32 to vector<16x256xf32>
    %14 = arith.maximumf %12, %13 : vector<16x256xf32>
    %c0_12 = arith.constant 0 : index
    %c0_13 = arith.constant 0 : index
    %15 = vector.load %arg7[%c0_12, %c0_13] : memref<256x256xf32, #tpu.memory_space<vmem>>, vector<256x256xf32>
    %c0_14 = arith.constant 0 : index
    %c0_15 = arith.constant 0 : index
    %16 = vector.load %arg8[%c0_14, %c0_15] : memref<1x256xf32, #tpu.memory_space<vmem>>, vector<1x256xf32>
    %c0_16 = arith.constant 0 : index
    %c0_17 = arith.constant 0 : index
    %17 = vector.load %arg9[%c0_16, %c0_17] : memref<256x256xf32, #tpu.memory_space<vmem>>, vector<256x256xf32>
    %c0_18 = arith.constant 0 : index
    %c0_19 = arith.constant 0 : index
    %18 = vector.load %arg10[%c0_18, %c0_19] : memref<1x256xf32, #tpu.memory_space<vmem>>, vector<1x256xf32>
    %cst_20 = arith.constant dense<0.000000e+00> : vector<16x256xf32>
    %19 = tpu.matmul %14, %15, %cst_20 {dimension_numbers = #tpu.dot_dimension_numbers<[1], [0], [0], [1], [0, 0, 1, 1], [], []>} : vector<16x256xf32>, vector<256x256xf32>, vector<16x256xf32> -> vector<16x256xf32>
    %20 = vector.broadcast %16 : vector<1x256xf32> to vector<16x256xf32>
    %21 = arith.addf %19, %20 : vector<16x256xf32>
    %cst_21 = arith.constant dense<0.000000e+00> : vector<16x256xf32>
    %22 = tpu.matmul %14, %17, %cst_21 {dimension_numbers = #tpu.dot_dimension_numbers<[1], [0], [0], [1], [0, 0, 1, 1], [], []>} : vector<16x256xf32>, vector<256x256xf32>, vector<16x256xf32> -> vector<16x256xf32>
    %23 = vector.broadcast %18 : vector<1x256xf32> to vector<16x256xf32>
    %24 = arith.addf %22, %23 : vector<16x256xf32>
    %cst_22 = arith.constant 5.000000e-01 : f32
    %25 = vector.broadcast %cst_22 : f32 to vector<16x256xf32>
    %26 = arith.mulf %25, %21 : vector<16x256xf32>
    %27 = math.tanh %26 : vector<16x256xf32>
    %cst_23 = arith.constant 5.000000e-01 : f32
    %28 = vector.broadcast %cst_23 : f32 to vector<16x256xf32>
    %29 = arith.mulf %28, %27 : vector<16x256xf32>
    %cst_24 = arith.constant 5.000000e-01 : f32
    %30 = vector.broadcast %cst_24 : f32 to vector<16x256xf32>
    %31 = arith.addf %29, %30 : vector<16x256xf32>
    %c0_25 = arith.constant 0 : index
    %c0_26 = arith.constant 0 : index
    %32 = vector.load %arg2[%c0_25, %c0_26] : memref<16x256xf32, #tpu.memory_space<vmem>>, vector<16x256xf32>
    %33 = arith.mulf %31, %32 : vector<16x256xf32>
    %34 = arith.addf %33, %24 : vector<16x256xf32>
    %c0_27 = arith.constant 0 : index
    %c0_28 = arith.constant 0 : index
    %35 = vector.load %arg11[%c0_27, %c0_28] : memref<16x256xf32, #tpu.memory_space<vmem>>, vector<16x256xf32>
    tpu.vector_store %arg11[%c0_27, %c0_28], %34 {strides = array<i32>} : memref<16x256xf32, #tpu.memory_space<vmem>>, vector<16x256xf32>,
    return
  }
  func.func @transform_0(%arg0: i32) -> (i32, i32) {
    %c0_i32 = arith.constant 0 : i32
    %c0_i32_0 = arith.constant 0 : i32
    return %arg0, %c0_i32 : i32, i32
  }
  func.func @transform_1(%arg0: i32) -> (i32, i32) {
    %c0_i32 = arith.constant 0 : i32
    %c0_i32_0 = arith.constant 0 : i32
    return %arg0, %c0_i32 : i32, i32
  }
  func.func @transform_2(%arg0: i32) -> (i32, i32) {
    %c0_i32 = arith.constant 0 : i32
    %c0_i32_0 = arith.constant 0 : i32
    %c0_i32_1 = arith.constant 0 : i32
    return %c0_i32, %c0_i32_0 : i32, i32
  }
  func.func @transform_3(%arg0: i32) -> (i32, i32) {
    %c0_i32 = arith.constant 0 : i32
    %c0_i32_0 = arith.constant 0 : i32
    %c0_i32_1 = arith.constant 0 : i32
    return %c0_i32, %c0_i32_0 : i32, i32
  }
  func.func @transform_4(%arg0: i32) -> (i32, i32) {
    %c0_i32 = arith.constant 0 : i32
    %c0_i32_0 = arith.constant 0 : i32
    %c0_i32_1 = arith.constant 0 : i32
    return %c0_i32, %c0_i32_0 : i32, i32
  }
  func.func @transform_5(%arg0: i32) -> (i32, i32) {
    %c0_i32 = arith.constant 0 : i32
    %c0_i32_0 = arith.constant 0 : i32
    %c0_i32_1 = arith.constant 0 : i32
    return %c0_i32, %c0_i32_0 : i32, i32
  }
  func.func @transform_6(%arg0: i32) -> (i32, i32) {
    %c0_i32 = arith.constant 0 : i32
    %c0_i32_0 = arith.constant 0 : i32
    %c0_i32_1 = arith.constant 0 : i32
    return %c0_i32, %c0_i32_0 : i32, i32
  }
  func.func @transform_7(%arg0: i32) -> (i32, i32) {
    %c0_i32 = arith.constant 0 : i32
    %c0_i32_0 = arith.constant 0 : i32
    %c0_i32_1 = arith.constant 0 : i32
    return %c0_i32, %c0_i32_0 : i32, i32
  }
  func.func @transform_8(%arg0: i32) -> (i32, i32) {
    %c0_i32 = arith.constant 0 : i32
    %c0_i32_0 = arith.constant 0 : i32
    %c0_i32_1 = arith.constant 0 : i32
    return %c0_i32, %c0_i32_0 : i32, i32
  }
  func.func @transform_9(%arg0: i32) -> (i32, i32) {
    %c0_i32 = arith.constant 0 : i32
    %c0_i32_0 = arith.constant 0 : i32
    %c0_i32_1 = arith.constant 0 : i32
    return %c0_i32, %c0_i32_0 : i32, i32
  }
  func.func @transform_10(%arg0: i32) -> (i32, i32) {
    %c0_i32 = arith.constant 0 : i32
    %c0_i32_0 = arith.constant 0 : i32
    return %arg0, %c0_i32 : i32, i32
  }
}

</mosaic_0001>

<llo_original>
// kernel: tpu_custom_call.1
$region0: #{tpu_custom_call.1}
  #allocation0 [shape = 'u32[]', space=smem, size = 0x4, offset = 0x4, fixed_abs, tag = 'smem constant byte address 0x4 - core index']
  #allocation1 [shape = 'u32[144,128]{1,0:T(1,128)}', space=vmem, size = 0x12000, scoped, tag = 'internal scratch']
  %s0 = inlined_call_operand.hbm [shape: f32[16,128], index: 0, kind: input, shape index: {}]
  %s1 = inlined_call_operand.hbm [shape: f32[16,256], index: 1, kind: input, shape index: {}]
  %s2 = inlined_call_operand.hbm [shape: f32[128,256], index: 2, kind: input, shape index: {}]
  %s3 = inlined_call_operand.vmem [shape: f32[1,256], index: 3, kind: input, shape index: {}]
  %s4 = inlined_call_operand.hbm [shape: f32[256,256], index: 4, kind: input, shape index: {}]
  %s5 = inlined_call_operand.vmem [shape: f32[1,256], index: 5, kind: input, shape index: {}]
  %s6 = inlined_call_operand.hbm [shape: f32[256,256], index: 6, kind: input, shape index: {}]
  %s7 = inlined_call_operand.vmem [shape: f32[1,256], index: 7, kind: input, shape index: {}]
  %s8 = inlined_call_operand.hbm [shape: f32[256,256], index: 8, kind: input, shape index: {}]
  %s9 = inlined_call_operand.vmem [shape: f32[1,256], index: 9, kind: input, shape index: {}]
  %s10 = inlined_call_operand.hbm [shape: f32[16,256], index: 10, kind: output, shape index: {}]
  %s11 = sld [smem:[#allocation0]]
  $region74: #{tpu_custom_call.1} parent=0
    _
  %s13 = ssub.s32 1, %s11
  %s14 = scalar_select 0, %s13, %s11
  $region1: #{tpu_custom_call.1} parent=0
    #allocation2 [shape = 'u8[8192]{0}', space=vmem, size = 0x2000, scoped, tag = 'input window, operand 0, single buffered']
    #allocation3 [shape = 's32[1]{0}', space=sflag, size = 0x4, scoped, tag = 'scoped memory for tpu_custom_call.1']
    #allocation4 [shape = 's32[1]{0}', space=sflag, size = 0x4, scoped, tag = 'scoped memory for tpu_custom_call.1']
    #allocation5 [shape = 'u8[16384]{0}', space=vmem, size = 0x4000, scoped, tag = 'input window, operand 1, single buffered']
    #allocation6 [shape = 's32[1]{0}', space=sflag, size = 0x4, scoped, tag = 'scoped memory for tpu_custom_call.1']
    #allocation7 [shape = 'u8[131072]{0}', space=vmem, size = 0x20000, scoped, tag = 'input window, operand 2, single buffered']
    #allocation8 [shape = 'u8[262144]{0}', space=vmem, size = 0x40000, scoped, tag = 'input window, operand 4, single buffered']
    #allocation9 [shape = 's32[1]{0}', space=sflag, size = 0x4, scoped, tag = 'scoped memory for tpu_custom_call.1']
    #allocation10 [shape = 'u8[262144]{0}', space=vmem, size = 0x40000, scoped, tag = 'input window, operand 6, single buffered']
    #allocation11 [shape = 'u8[262144]{0}', space=vmem, size = 0x40000, scoped, tag = 'input window, operand 8, single buffered']
    #allocation12 [shape = 's32[1]{0}', space=sflag, size = 0x4, scoped, tag = 'scoped memory for tpu_custom_call.1']
    #allocation13 [shape = 'u8[16384]{0}', space=vmem, size = 0x4000, scoped, tag = 'output window, operand 0, single buffered']
    %15 = vsyncpa [#allocation3], 0
    %16 = vsyncpa [#allocation6], 0
    %17 = vsyncpa [#allocation9], 0
    %18 = vsyncpa [#allocation12], 0
    %19 = vsyncpa [#allocation4], 0
    // Predicated region
    $region2: #{tpu_custom_call.1} parent=1 // pred_check
      _
    $region3: #{tpu_custom_call.1} parent=1 // pred_check_branch
      %21 = sbr.rel (0) target = $region5
    $region4: #{tpu_custom_call.1} parent=1 // pred_region
      %s23 = ssub.s32 256, 256
      %24 = vsyncadd [#allocation3], %s23
      %s25 = sshll.u32 [#allocation2], 4
      %s26 = int_to_ptr.vmem [resolvable:$true] %s25
      %31 = dma.hbm_to_vmem [thread:$0]  %s0, 256, %s26, [#allocation3], 128, 128, 8
    $region5: #{tpu_custom_call.1} parent=1 // pred_fallthru
      _
    // Predicated region
    $region6: #{tpu_custom_call.1} parent=1 // pred_check
      _
    $region7: #{tpu_custom_call.1} parent=1 // pred_check_branch
      %33 = sbr.rel (0) target = $region9
    $region8: #{tpu_custom_call.1} parent=1 // pred_region
      %s35 = ssub.s32 512, 512
      %36 = vsyncadd [#allocation6], %s35
      %s37 = sshll.u32 [#allocation5], 4
      %s38 = int_to_ptr.vmem [resolvable:$true] %s37
      %43 = dma.hbm_to_vmem [thread:$0]  %s1, 512, %s38, [#allocation6], 256, 256, 16
    $region9: #{tpu_custom_call.1} parent=1 // pred_fallthru
      _
    // Predicated region
    $region10: #{tpu_custom_call.1} parent=1 // pred_check
      _
    $region11: #{tpu_custom_call.1} parent=1 // pred_check_branch
      %45 = sbr.rel (0) target = $region13
    $region12: #{tpu_custom_call.1} parent=1 // pred_region
      %s47 = ssub.s32 4096, 4096
      %48 = vsyncadd [#allocation6], %s47
      %s49 = sshll.u32 [#allocation7], 4
      %s50 = int_to_ptr.vmem [resolvable:$true] %s49
      %55 = dma.hbm_to_vmem [thread:$0]  %s2, 4096, %s50, [#allocation6], 256, 256, 16
    $region13: #{tpu_custom_call.1} parent=1 // pred_fallthru
      _
    // Predicated region
    $region14: #{tpu_custom_call.1} parent=1 // pred_check
      _
    $region15: #{tpu_custom_call.1} parent=1 // pred_check_branch
      %57 = sbr.rel (0) target = $region17
    $region16: #{tpu_custom_call.1} parent=1 // pred_region
      _
    $region17: #{tpu_custom_call.1} parent=1 // pred_fallthru
      _
    // Predicated region
    $region18: #{tpu_custom_call.1} parent=1 // pred_check
      _
    $region19: #{tpu_custom_call.1} parent=1 // pred_check_branch
      %59 = sbr.rel (0) target = $region21
    $region20: #{tpu_custom_call.1} parent=1 // pred_region
      %s61 = ssub.s32 8192, 8192
      %62 = vsyncadd [#allocation9], %s61
      %s63 = sshll.u32 [#allocation8], 4
      %s64 = int_to_ptr.vmem [resolvable:$true] %s63
      %69 = dma.hbm_to_vmem [thread:$0]  %s4, 8192, %s64, [#allocation9], 256, 256, 16
    $region21: #{tpu_custom_call.1} parent=1 // pred_fallthru
      _
    // Predicated region
    $region22: #{tpu_custom_call.1} parent=1 // pred_check
      _
    $region23: #{tpu_custom_call.1} parent=1 // pred_check_branch
      %71 = sbr.rel (0) target = $region25
    $region24: #{tpu_custom_call.1} parent=1 // pred_region
      _
    $region25: #{tpu_custom_call.1} parent=1 // pred_fallthru
      _
    // Predicated region
    $region26: #{tpu_custom_call.1} parent=1 // pred_check
      _
    $region27: #{tpu_custom_call.1} parent=1 // pred_check_branch
      %73 = sbr.rel (0) target = $region29
    $region28: #{tpu_custom_call.1} parent=1 // pred_region
      %s75 = ssub.s32 8192, 8192
      %76 = vsyncadd [#allocation9], %s75
      %s77 = sshll.u32 [#allocation10], 4
      %s78 = int_to_ptr.vmem [resolvable:$true] %s77
      %83 = dma.hbm_to_vmem [thread:$0]  %s6, 8192, %s78, [#allocation9], 256, 256, 16
    $region29: #{tpu_custom_call.1} parent=1 // pred_fallthru
      _
    // Predicated region
    $region30: #{tpu_custom_call.1} parent=1 // pred_check
      _
    $region31: #{tpu_custom_call.1} parent=1 // pred_check_branch
      %85 = sbr.rel (0) target = $region33
    $region32: #{tpu_custom_call.1} parent=1 // pred_region
      _
    $region33: #{tpu_custom_call.1} parent=1 // pred_fallthru
      _
    // Predicated region
    $region34: #{tpu_custom_call.1} parent=1 // pred_check
      _
    $region35: #{tpu_custom_call.1} parent=1 // pred_check_branch
      %87 = sbr.rel (0) target = $region37
    $region36: #{tpu_custom_call.1} parent=1 // pred_region
      %s89 = ssub.s32 8192, 8192
      %90 = vsyncadd [#allocation12], %s89
      %s91 = sshll.u32 [#allocation11], 4
      %s92 = int_to_ptr.vmem [resolvable:$true] %s91
      %97 = dma.hbm_to_vmem [thread:$0]  %s8, 8192, %s92, [#allocation12], 256, 256, 16
    $region37: #{tpu_custom_call.1} parent=1 // pred_fallthru
      _
    // Predicated region
    $region38: #{tpu_custom_call.1} parent=1 // pred_check
      _
    $region39: #{tpu_custom_call.1} parent=1 // pred_check_branch
      %99 = sbr.rel (0) target = $region41
    $region40: #{tpu_custom_call.1} parent=1 // pred_region
      _
    $region41: #{tpu_custom_call.1} parent=1 // pred_fallthru
      _
    // Predicated region
    $region42: #{tpu_custom_call.1} parent=1 // pred_check
      _
    $region43: #{tpu_custom_call.1} parent=1 // pred_check_branch
      %101 = sbr.rel (0) target = $region45
    $region44: #{tpu_custom_call.1} parent=1 // pred_region
      %102 = dma.done [#allocation3], 256
    $region45: #{tpu_custom_call.1} parent=1 // pred_fallthru
      _
    // Predicated region
    $region46: #{tpu_custom_call.1} parent=1 // pred_check
      _
    $region47: #{tpu_custom_call.1} parent=1 // pred_check_branch
      %104 = sbr.rel (0) target = $region49
    $region48: #{tpu_custom_call.1} parent=1 // pred_region
      %105 = dma.done [#allocation6], 512
    $region49: #{tpu_custom_call.1} parent=1 // pred_fallthru
      _
    // Predicated region
    $region50: #{tpu_custom_call.1} parent=1 // pred_check
      _
    $region51: #{tpu_custom_call.1} parent=1 // pred_check_branch
      %107 = sbr.rel (0) target = $region53
    $region52: #{tpu_custom_call.1} parent=1 // pred_region
      %108 = dma.done [#allocation6], 4096
    $region53: #{tpu_custom_call.1} parent=1 // pred_fallthru
      _
    // Predicated region
    $region54: #{tpu_custom_call.1} parent=1 // pred_check
      _
    $region55: #{tpu_custom_call.1} parent=1 // pred_check_branch
      %110 = sbr.rel (0) target = $region57
    $region56: #{tpu_custom_call.1} parent=1 // pred_region
      %111 = dma.done [#allocation9], 8192
    $region57: #{tpu_custom_call.1} parent=1 // pred_fallthru
      _
    // Predicated region
    $region58: #{tpu_custom_call.1} parent=1 // pred_check
      _
    $region59: #{tpu_custom_call.1} parent=1 // pred_check_branch
      %113 = sbr.rel (0) target = $region61
    $region60: #{tpu_custom_call.1} parent=1 // pred_region
      %114 = dma.done [#allocation9], 8192
    $region61: #{tpu_custom_call.1} parent=1 // pred_fallthru
      _
    // Predicated region
    $region62: #{tpu_custom_call.1} parent=1 // pred_check
      _
    $region63: #{tpu_custom_call.1} parent=1 // pred_check_branch
      %116 = sbr.rel (0) target = $region65
    $region64: #{tpu_custom_call.1} parent=1 // pred_region
      %117 = dma.done [#allocation12], 8192
    $region65: #{tpu_custom_call.1} parent=1 // pred_fallthru
      _
    %v118 = vld [vmem:[#allocation2] sm:$0xff]
    %v119 = vld [vmem:[#allocation2 + $0x8] sm:$0xff]
    %v120 = vld [vmem:[#allocation7] sm:$0xff]
    %v121 = vld [vmem:[#allocation7 + $0x8] sm:$0xff]
    %v122 = vld [vmem:[#allocation7 + $0x10] sm:$0xff]
    %v123 = vld [vmem:[#allocation7 + $0x18] sm:$0xff]
    %v124 = vld [vmem:[#allocation7 + $0x20] sm:$0xff]
    %v125 = vld [vmem:[#allocation7 + $0x28] sm:$0xff]
    %v126 = vld [vmem:[#allocation7 + $0x30] sm:$0xff]
    %v127 = vld [vmem:[#allocation7 + $0x38] sm:$0xff]
    %v128 = vld [vmem:[#allocation7 + $0x40] sm:$0xff]
    %v129 = vld [vmem:[#allocation7 + $0x48] sm:$0xff]
    %v130 = vld [vmem:[#allocation7 + $0x50] sm:$0xff]
    %v131 = vld [vmem:[#allocation7 + $0x58] sm:$0xff]
    %v132 = vld [vmem:[#allocation7 + $0x60] sm:$0xff]
    %v133 = vld [vmem:[#allocation7 + $0x68] sm:$0xff]
    %v134 = vld [vmem:[#allocation7 + $0x70] sm:$0xff]
    %v135 = vld [vmem:[#allocation7 + $0x78] sm:$0xff]
    %v136 = vld [vmem:[#allocation7 + $0x80] sm:$0xff]
    %v137 = vld [vmem:[#allocation7 + $0x88] sm:$0xff]
    %v138 = vld [vmem:[#allocation7 + $0x90] sm:$0xff]
    %v139 = vld [vmem:[#allocation7 + $0x98] sm:$0xff]
    %v140 = vld [vmem:[#allocation7 + $0xa0] sm:$0xff]
    %v141 = vld [vmem:[#allocation7 + $0xa8] sm:$0xff]
    %v142 = vld [vmem:[#allocation7 + $0xb0] sm:$0xff]
    %v143 = vld [vmem:[#allocation7 + $0xb8] sm:$0xff]
    %v144 = vld [vmem:[#allocation7 + $0xc0] sm:$0xff]
    %v145 = vld [vmem:[#allocation7 + $0xc8] sm:$0xff]
    %v146 = vld [vmem:[#allocation7 + $0xd0] sm:$0xff]
    %v147 = vld [vmem:[#allocation7 + $0xd8] sm:$0xff]
    %v148 = vld [vmem:[#allocation7 + $0xe0] sm:$0xff]
    %v149 = vld [vmem:[#allocation7 + $0xe8] sm:$0xff]
    %v150 = vld [vmem:[#allocation7 + $0xf0] sm:$0xff]
    %v151 = vld [vmem:[#allocation7 + $0xf8] sm:$0xff]
    %v152 = vld [vmem:[%s3] sm:$0x3]
    %v154 = vlaneseq
    %v155 = vshrl.u32 %v154, 7
    %v156 = vsub.s32 0, %v155
    %v157 = vrot.slane %v152, %v156
    %v158 = vlaneseq
    %v159 = vshrl.u32 %v158, 7
    %v160 = vsub.s32 1, %v159
    %v161 = vrot.slane %v152, %v160
    %164 = vmatprep.subr.mxu0 %v121
    %165 = vmatpush1.msra.mxu0 %v120
    %166 = vmatprep.subr.mxu0 %v123
    %167 = vmatpush1.msra.mxu0 %v122
    %168 = vmatprep.subr.mxu0 %v125
    %169 = vmatpush1.msra.mxu0 %v124
    %170 = vmatprep.subr.mxu0 %v127
    %171 = vmatpush1.msra.mxu0 %v126
    %172 = vmatprep.subr.mxu0 %v129
    %173 = vmatpush1.msra.mxu0 %v128
    %174 = vmatprep.subr.mxu0 %v131
    %175 = vmatpush1.msra.mxu0 %v130
    %176 = vmatprep.subr.mxu0 %v133
    %177 = vmatpush1.msra.mxu0 %v132
    %178 = vmatprep.subr.mxu0 %v135
    %179 = vmatpush1.msra.mxu0 %v134
    %180 = vmatprep.subr.mxu0 %v137
    %181 = vmatpush1.msra.mxu0 %v136
    %182 = vmatprep.subr.mxu0 %v139
    %183 = vmatpush1.msra.mxu0 %v138
    %184 = vmatprep.subr.mxu0 %v141
    %185 = vmatpush1.msra.mxu0 %v140
    %186 = vmatprep.subr.mxu0 %v143
    %187 = vmatpush1.msra.mxu0 %v142
    %188 = vmatprep.subr.mxu0 %v145
    %189 = vmatpush1.msra.mxu0 %v144
    %190 = vmatprep.subr.mxu0 %v147
    %191 = vmatpush1.msra.mxu0 %v146
    %192 = vmatprep.subr.mxu0 %v149
    %193 = vmatpush1.msra.mxu0 %v148
    %194 = vmatprep.subr.mxu0 %v151
    %195 = vmatpush1.msra.mxu0 %v150
    %196 = vmatprep.subr.mxu0 0.0
    %197 = vmatpush1.msra.mxu0 0.0
    %198 = vmatprep.subr.mxu0 0.0
    %199 = vmatpush1.msra.mxu0 0.0
    %200 = vmatprep.subr.mxu0 0.0
    %201 = vmatpush1.msra.mxu0 0.0
    %202 = vmatprep.subr.mxu0 0.0
    %203 = vmatpush1.msra.mxu0 0.0
    %204 = vmatprep.subr.mxu0 0.0
    %205 = vmatpush1.msra.mxu0 0.0
    %206 = vmatprep.subr.mxu0 0.0
    %207 = vmatpush1.msra.mxu0 0.0
    %208 = vmatprep.subr.mxu0 0.0
    %209 = vmatpush1.msra.mxu0 0.0
    %210 = vmatprep.subr.mxu0 0.0
    %211 = vmatpush1.msra.mxu0 0.0
    %212 = vmatprep.subr.mxu0 0.0
    %213 = vmatpush1.msra.mxu0 0.0
    %214 = vmatprep.subr.mxu0 0.0
    %215 = vmatpush1.msra.mxu0 0.0
    %216 = vmatprep.subr.mxu0 0.0
    %217 = vmatpush1.msra.mxu0 0.0
    %218 = vmatprep.subr.mxu0 0.0
    %219 = vmatpush1.msra.mxu0 0.0
    %220 = vmatprep.subr.mxu0 0.0
    %221 = vmatpush1.msra.mxu0 0.0
    %222 = vmatprep.subr.mxu0 0.0
    %223 = vmatpush1.msra.mxu0 0.0
    %224 = vmatprep.subr.mxu0 0.0
    %225 = vmatpush1.msra.mxu0 0.0
    %226 = vmatprep.subr.mxu0 0.0
    %227 = vmatpush1.msra.mxu0 0.0
    %228 = vmatprep.mubr.f32.mxu0 0.0
    %229 = vmatmul.mubr.f32.gmra.mrb[0].mxu0 %v118
    %v230 = vpop.f32.mrb[0].mxu0
    %v231 = vadd.f32 %v157, %v230
    %v232 = vpop.f32.mrb[0].mxu0
    %v233 = vadd.f32 %v161, %v232
    %234 = vmatprep.mubr.f32.mxu0 0.0
    %235 = vmatmul.mubr.f32.gmra.mrb[0].mxu0 %v119
    %v236 = vpop.f32.mrb[0].mxu0
    %v237 = vadd.f32 %v157, %v236
    %v238 = vpop.f32.mrb[0].mxu0
    %v239 = vadd.f32 %v161, %v238
    %240 = vdwg.mxu0
    %v241 = vmax.f32 %v231, 0.0
    %v242 = vmax.f32 %v233, 0.0
    %v243 = vmax.f32 %v237, 0.0
    %v244 = vmax.f32 %v239, 0.0
    %v245 = vld [vmem:[#allocation8] sm:$0xff]
    %v246 = vld [vmem:[#allocation8 + $0x8] sm:$0xff]
    %v247 = vld [vmem:[#allocation8 + $0x10] sm:$0xff]
    %v248 = vld [vmem:[#allocation8 + $0x18] sm:$0xff]
    %v249 = vld [vmem:[#allocation8 + $0x20] sm:$0xff]
    %v250 = vld [vmem:[#allocation8 + $0x28] sm:$0xff]
    %v251 = vld [vmem:[#allocation8 + $0x30] sm:$0xff]
    %v252 = vld [vmem:[#allocation8 + $0x38] sm:$0xff]
    %v253 = vld [vmem:[#allocation8 + $0x40] sm:$0xff]
    %v254 = vld [vmem:[#allocation8 + $0x48] sm:$0xff]
    %v255 = vld [vmem:[#allocation8 + $0x50] sm:$0xff]
    %v256 = vld [vmem:[#allocation8 + $0x58] sm:$0xff]
    %v257 = vld [vmem:[#allocation8 + $0x60] sm:$0xff]
    %v258 = vld [vmem:[#allocation8 + $0x68] sm:$0xff]
    %v259 = vld [vmem:[#allocation8 + $0x70] sm:$0xff]
    %v260 = vld [vmem:[#allocation8 + $0x78] sm:$0xff]
    %v261 = vld [vmem:[#allocation8 + $0x80] sm:$0xff]
    %v262 = vld [vmem:[#allocation8 + $0x88] sm:$0xff]
    %v263 = vld [vmem:[#allocation8 + $0x90] sm:$0xff]
    %v264 = vld [vmem:[#allocation8 + $0x98] sm:$0xff]
    %v265 = vld [vmem:[#allocation8 + $0xa0] sm:$0xff]
    %v266 = vld [vmem:[#allocation8 + $0xa8] sm:$0xff]
    %v267 = vld [vmem:[#allocation8 + $0xb0] sm:$0xff]
    %v268 = vld [vmem:[#allocation8 + $0xb8] sm:$0xff]
    %v269 = vld [vmem:[#allocation8 + $0xc0] sm:$0xff]
    %v270 = vld [vmem:[#allocation8 + $0xc8] sm:$0xff]
    %v271 = vld [vmem:[#allocation8 + $0xd0] sm:$0xff]
    %v272 = vld [vmem:[#allocation8 + $0xd8] sm:$0xff]
    %v273 = vld [vmem:[#allocation8 + $0xe0] sm:$0xff]
    %v274 = vld [vmem:[#allocation8 + $0xe8] sm:$0xff]
    %v275 = vld [vmem:[#allocation8 + $0xf0] sm:$0xff]
    %v276 = vld [vmem:[#allocation8 + $0xf8] sm:$0xff]
    %v277 = vld [vmem:[#allocation8 + $0x100] sm:$0xff]
    %v278 = vld [vmem:[#allocation8 + $0x108] sm:$0xff]
    %v279 = vld [vmem:[#allocation8 + $0x110] sm:$0xff]
    %v280 = vld [vmem:[#allocation8 + $0x118] sm:$0xff]
    %v281 = vld [vmem:[#allocation8 + $0x120] sm:$0xff]
    %v282 = vld [vmem:[#allocation8 + $0x128] sm:$0xff]
    %v283 = vld [vmem:[#allocation8 + $0x130] sm:$0xff]
    %v284 = vld [vmem:[#allocation8 + $0x138] sm:$0xff]
    %v285 = vld [vmem:[#allocation8 + $0x140] sm:$0xff]
    %v286 = vld [vmem:[#allocation8 + $0x148] sm:$0xff]
    %v287 = vld [vmem:[#allocation8 + $0x150] sm:$0xff]
    %v288 = vld [vmem:[#allocation8 + $0x158] sm:$0xff]
    %v289 = vld [vmem:[#allocation8 + $0x160] sm:$0xff]
    %v290 = vld [vmem:[#allocation8 + $0x168] sm:$0xff]
    %v291 = vld [vmem:[#allocation8 + $0x170] sm:$0xff]
    %v292 = vld [vmem:[#allocation8 + $0x178] sm:$0xff]
    %v293 = vld [vmem:[#allocation8 + $0x180] sm:$0xff]
    %v294 = vld [vmem:[#allocation8 + $0x188] sm:$0xff]
    %v295 = vld [vmem:[#allocation8 + $0x190] sm:$0xff]
    %v296 = vld [vmem:[#allocation8 + $0x198] sm:$0xff]
    %v297 = vld [vmem:[#allocation8 + $0x1a0] sm:$0xff]
    %v298 = vld [vmem:[#allocation8 + $0x1a8] sm:$0xff]
    %v299 = vld [vmem:[#allocation8 + $0x1b0] sm:$0xff]
    %v300 = vld [vmem:[#allocation8 + $0x1b8] sm:$0xff]
    %v301 = vld [vmem:[#allocation8 + $0x1c0] sm:$0xff]
    %v302 = vld [vmem:[#allocation8 + $0x1c8] sm:$0xff]
    %v303 = vld [vmem:[#allocation8 + $0x1d0] sm:$0xff]
    %v304 = vld [vmem:[#allocation8 + $0x1d8] sm:$0xff]
    %v305 = vld [vmem:[#allocation8 + $0x1e0] sm:$0xff]
    %v306 = vld [vmem:[#allocation8 + $0x1e8] sm:$0xff]
    %v307 = vld [vmem:[#allocation8 + $0x1f0] sm:$0xff]
    %v308 = vld [vmem:[#allocation8 + $0x1f8] sm:$0xff]
    %v309 = vld [vmem:[%s5] sm:$0x3]
    %v311 = vlaneseq
    %v312 = vshrl.u32 %v311, 7
    %v313 = vsub.s32 0, %v312
    %v314 = vrot.slane %v309, %v313
    %v315 = vlaneseq
    %v316 = vshrl.u32 %v315, 7
    %v317 = vsub.s32 1, %v316
    %v318 = vrot.slane %v309, %v317
    %321 = vmatprep.subr.mxu0 %v246
    %322 = vmatpush1.msra.mxu0 %v245
    %323 = vmatprep.subr.mxu0 %v248
    %324 = vmatpush1.msra.mxu0 %v247
    %325 = vmatprep.subr.mxu0 %v250
    %326 = vmatpush1.msra.mxu0 %v249
    %327 = vmatprep.subr.mxu0 %v252
    %328 = vmatpush1.msra.mxu0 %v251
    %329 = vmatprep.subr.mxu0 %v254
    %330 = vmatpush1.msra.mxu0 %v253
    %331 = vmatprep.subr.mxu0 %v256
    %332 = vmatpush1.msra.mxu0 %v255
    %333 = vmatprep.subr.mxu0 %v258
    %334 = vmatpush1.msra.mxu0 %v257
    %335 = vmatprep.subr.mxu0 %v260
    %336 = vmatpush1.msra.mxu0 %v259
    %337 = vmatprep.subr.mxu0 %v262
    %338 = vmatpush1.msra.mxu0 %v261
    %339 = vmatprep.subr.mxu0 %v264
    %340 = vmatpush1.msra.mxu0 %v263
    %341 = vmatprep.subr.mxu0 %v266
    %342 = vmatpush1.msra.mxu0 %v265
    %343 = vmatprep.subr.mxu0 %v268
    %344 = vmatpush1.msra.mxu0 %v267
    %345 = vmatprep.subr.mxu0 %v270
    %346 = vmatpush1.msra.mxu0 %v269
    %347 = vmatprep.subr.mxu0 %v272
    %348 = vmatpush1.msra.mxu0 %v271
    %349 = vmatprep.subr.mxu0 %v274
    %350 = vmatpush1.msra.mxu0 %v273
    %351 = vmatprep.subr.mxu0 %v276
    %352 = vmatpush1.msra.mxu0 %v275
    %353 = vmatprep.subr.mxu0 %v278
    %354 = vmatpush1.msra.mxu0 %v277
    %355 = vmatprep.subr.mxu0 %v280
    %356 = vmatpush1.msra.mxu0 %v279
    %357 = vmatprep.subr.mxu0 %v282
    %358 = vmatpush1.msra.mxu0 %v281
    %359 = vmatprep.subr.mxu0 %v284
    %360 = vmatpush1.msra.mxu0 %v283
    %361 = vmatprep.subr.mxu0 %v286
    %362 = vmatpush1.msra.mxu0 %v285
    %363 = vmatprep.subr.mxu0 %v288
    %364 = vmatpush1.msra.mxu0 %v287
    %365 = vmatprep.subr.mxu0 %v290
    %366 = vmatpush1.msra.mxu0 %v289
    %367 = vmatprep.subr.mxu0 %v292
    %368 = vmatpush1.msra.mxu0 %v291
    %369 = vmatprep.subr.mxu0 %v294
    %370 = vmatpush1.msra.mxu0 %v293
    %371 = vmatprep.subr.mxu0 %v296
    %372 = vmatpush1.msra.mxu0 %v295
    %373 = vmatprep.subr.mxu0 %v298
    %374 = vmatpush1.msra.mxu0 %v297
    %375 = vmatprep.subr.mxu0 %v300
    %376 = vmatpush1.msra.mxu0 %v299
    %377 = vmatprep.subr.mxu0 %v302
    %378 = vmatpush1.msra.mxu0 %v301
    %379 = vmatprep.subr.mxu0 %v304
    %380 = vmatpush1.msra.mxu0 %v303
    %381 = vmatprep.subr.mxu0 %v306
    %382 = vmatpush1.msra.mxu0 %v305
    %383 = vmatprep.subr.mxu0 %v308
    %384 = vmatpush1.msra.mxu0 %v307
    %385 = vmatprep.mubr.f32.mxu0 %v242
    %386 = vmatmul.mubr.f32.gmra.mrb[0].mxu0 %v241
    %v387 = vpop.f32.mrb[0].mxu0
    %v388 = vadd.f32 %v314, %v387
    %v389 = vpop.f32.mrb[0].mxu0
    %v390 = vadd.f32 %v318, %v389
    %391 = vmatprep.mubr.f32.mxu0 %v244
    %392 = vmatmul.mubr.f32.gmra.mrb[0].mxu0 %v243
    %v393 = vpop.f32.mrb[0].mxu0
    %v394 = vadd.f32 %v314, %v393
    %v395 = vpop.f32.mrb[0].mxu0
    %v396 = vadd.f32 %v318, %v395
    %397 = vdwg.mxu0
    %v398 = vmax.f32 %v388, 0.0
    %v399 = vmax.f32 %v390, 0.0
    %v400 = vmax.f32 %v394, 0.0
    %v401 = vmax.f32 %v396, 0.0
    %v402 = vld [vmem:[#allocation10] sm:$0xff]
    %v403 = vld [vmem:[#allocation10 + $0x8] sm:$0xff]
    %v404 = vld [vmem:[#allocation10 + $0x10] sm:$0xff]
    %v405 = vld [vmem:[#allocation10 + $0x18] sm:$0xff]
    %v406 = vld [vmem:[#allocation10 + $0x20] sm:$0xff]
    %v407 = vld [vmem:[#allocation10 + $0x28] sm:$0xff]
    %v408 = vld [vmem:[#allocation10 + $0x30] sm:$0xff]
    %v409 = vld [vmem:[#allocation10 + $0x38] sm:$0xff]
    %v410 = vld [vmem:[#allocation10 + $0x40] sm:$0xff]
    %v411 = vld [vmem:[#allocation10 + $0x48] sm:$0xff]
    %v412 = vld [vmem:[#allocation10 + $0x50] sm:$0xff]
    %v413 = vld [vmem:[#allocation10 + $0x58] sm:$0xff]
    %v414 = vld [vmem:[#allocation10 + $0x60] sm:$0xff]
    %v415 = vld [vmem:[#allocation10 + $0x68] sm:$0xff]
    %v416 = vld [vmem:[#allocation10 + $0x70] sm:$0xff]
    %v417 = vld [vmem:[#allocation10 + $0x78] sm:$0xff]
    %v418 = vld [vmem:[#allocation10 + $0x80] sm:$0xff]
    %v419 = vld [vmem:[#allocation10 + $0x88] sm:$0xff]
    %v420 = vld [vmem:[#allocation10 + $0x90] sm:$0xff]
    %v421 = vld [vmem:[#allocation10 + $0x98] sm:$0xff]
    %v422 = vld [vmem:[#allocation10 + $0xa0] sm:$0xff]
    %v423 = vld [vmem:[#allocation10 + $0xa8] sm:$0xff]
    %v424 = vld [vmem:[#allocation10 + $0xb0] sm:$0xff]
    %v425 = vld [vmem:[#allocation10 + $0xb8] sm:$0xff]
    %v426 = vld [vmem:[#allocation10 + $0xc0] sm:$0xff]
    %v427 = vld [vmem:[#allocation10 + $0xc8] sm:$0xff]
    %v428 = vld [vmem:[#allocation10 + $0xd0] sm:$0xff]
    %v429 = vld [vmem:[#allocation10 + $0xd8] sm:$0xff]
    %v430 = vld [vmem:[#allocation10 + $0xe0] sm:$0xff]
    %v431 = vld [vmem:[#allocation10 + $0xe8] sm:$0xff]
    %v432 = vld [vmem:[#allocation10 + $0xf0] sm:$0xff]
    %v433 = vld [vmem:[#allocation10 + $0xf8] sm:$0xff]
    %v434 = vld [vmem:[#allocation10 + $0x100] sm:$0xff]
    %v435 = vld [vmem:[#allocation10 + $0x108] sm:$0xff]
    %v436 = vld [vmem:[#allocation10 + $0x110] sm:$0xff]
    %v437 = vld [vmem:[#allocation10 + $0x118] sm:$0xff]
    %v438 = vld [vmem:[#allocation10 + $0x120] sm:$0xff]
    %v439 = vld [vmem:[#allocation10 + $0x128] sm:$0xff]
    %v440 = vld [vmem:[#allocation10 + $0x130] sm:$0xff]
    %v441 = vld [vmem:[#allocation10 + $0x138] sm:$0xff]
    %v442 = vld [vmem:[#allocation10 + $0x140] sm:$0xff]
    %v443 = vld [vmem:[#allocation10 + $0x148] sm:$0xff]
    %v444 = vld [vmem:[#allocation10 + $0x150] sm:$0xff]
    %v445 = vld [vmem:[#allocation10 + $0x158] sm:$0xff]
    %v446 = vld [vmem:[#allocation10 + $0x160] sm:$0xff]
    %v447 = vld [vmem:[#allocation10 + $0x168] sm:$0xff]
    %v448 = vld [vmem:[#allocation10 + $0x170] sm:$0xff]
    %v449 = vld [vmem:[#allocation10 + $0x178] sm:$0xff]
    %v450 = vld [vmem:[#allocation10 + $0x180] sm:$0xff]
    %v451 = vld [vmem:[#allocation10 + $0x188] sm:$0xff]
    %v452 = vld [vmem:[#allocation10 + $0x190] sm:$0xff]
    %v453 = vld [vmem:[#allocation10 + $0x198] sm:$0xff]
    %v454 = vld [vmem:[#allocation10 + $0x1a0] sm:$0xff]
    %v455 = vld [vmem:[#allocation10 + $0x1a8] sm:$0xff]
    %v456 = vld [vmem:[#allocation10 + $0x1b0] sm:$0xff]
    %v457 = vld [vmem:[#allocation10 + $0x1b8] sm:$0xff]
    %v458 = vld [vmem:[#allocation10 + $0x1c0] sm:$0xff]
    %v459 = vld [vmem:[#allocation10 + $0x1c8] sm:$0xff]
    %v460 = vld [vmem:[#allocation10 + $0x1d0] sm:$0xff]
    %v461 = vld [vmem:[#allocation10 + $0x1d8] sm:$0xff]
    %v462 = vld [vmem:[#allocation10 + $0x1e0] sm:$0xff]
    %v463 = vld [vmem:[#allocation10 + $0x1e8] sm:$0xff]
    %v464 = vld [vmem:[#allocation10 + $0x1f0] sm:$0xff]
    %v465 = vld [vmem:[#allocation10 + $0x1f8] sm:$0xff]
    %v466 = vld [vmem:[%s7] sm:$0x3]
    %v467 = vld [vmem:[#allocation11] sm:$0xff]
    %v468 = vld [vmem:[#allocation11 + $0x8] sm:$0xff]
    %v469 = vld [vmem:[#allocation11 + $0x10] sm:$0xff]
    %v470 = vld [vmem:[#allocation11 + $0x18] sm:$0xff]
    %v471 = vld [vmem:[#allocation11 + $0x20] sm:$0xff]
    %v472 = vld [vmem:[#allocation11 + $0x28] sm:$0xff]
    %v473 = vld [vmem:[#allocation11 + $0x30] sm:$0xff]
    %v474 = vld [vmem:[#allocation11 + $0x38] sm:$0xff]
    %v475 = vld [vmem:[#allocation11 + $0x40] sm:$0xff]
    %v476 = vld [vmem:[#allocation11 + $0x48] sm:$0xff]
    %v477 = vld [vmem:[#allocation11 + $0x50] sm:$0xff]
    %v478 = vld [vmem:[#allocation11 + $0x58] sm:$0xff]
    %v479 = vld [vmem:[#allocation11 + $0x60] sm:$0xff]
    %v480 = vld [vmem:[#allocation11 + $0x68] sm:$0xff]
    %v481 = vld [vmem:[#allocation11 + $0x70] sm:$0xff]
    %v482 = vld [vmem:[#allocation11 + $0x78] sm:$0xff]
    %v483 = vld [vmem:[#allocation11 + $0x80] sm:$0xff]
    %v484 = vld [vmem:[#allocation11 + $0x88] sm:$0xff]
    %v485 = vld [vmem:[#allocation11 + $0x90] sm:$0xff]
    %v486 = vld [vmem:[#allocation11 + $0x98] sm:$0xff]
    %v487 = vld [vmem:[#allocation11 + $0xa0] sm:$0xff]
    %v488 = vld [vmem:[#allocation11 + $0xa8] sm:$0xff]
    %v489 = vld [vmem:[#allocation11 + $0xb0] sm:$0xff]
    %v490 = vld [vmem:[#allocation11 + $0xb8] sm:$0xff]
    %v491 = vld [vmem:[#allocation11 + $0xc0] sm:$0xff]
    %v492 = vld [vmem:[#allocation11 + $0xc8] sm:$0xff]
    %v493 = vld [vmem:[#allocation11 + $0xd0] sm:$0xff]
    %v494 = vld [vmem:[#allocation11 + $0xd8] sm:$0xff]
    %v495 = vld [vmem:[#allocation11 + $0xe0] sm:$0xff]
    %v496 = vld [vmem:[#allocation11 + $0xe8] sm:$0xff]
    %v497 = vld [vmem:[#allocation11 + $0xf0] sm:$0xff]
    %v498 = vld [vmem:[#allocation11 + $0xf8] sm:$0xff]
    %v499 = vld [vmem:[#allocation11 + $0x100] sm:$0xff]
    %v500 = vld [vmem:[#allocation11 + $0x108] sm:$0xff]
    %v501 = vld [vmem:[#allocation11 + $0x110] sm:$0xff]
    %v502 = vld [vmem:[#allocation11 + $0x118] sm:$0xff]
    %v503 = vld [vmem:[#allocation11 + $0x120] sm:$0xff]
    %v504 = vld [vmem:[#allocation11 + $0x128] sm:$0xff]
    %v505 = vld [vmem:[#allocation11 + $0x130] sm:$0xff]
    %v506 = vld [vmem:[#allocation11 + $0x138] sm:$0xff]
    %v507 = vld [vmem:[#allocation11 + $0x140] sm:$0xff]
    %v508 = vld [vmem:[#allocation11 + $0x148] sm:$0xff]
    %v509 = vld [vmem:[#allocation11 + $0x150] sm:$0xff]
    %v510 = vld [vmem:[#allocation11 + $0x158] sm:$0xff]
    %v511 = vld [vmem:[#allocation11 + $0x160] sm:$0xff]
    %v512 = vld [vmem:[#allocation11 + $0x168] sm:$0xff]
    %v513 = vld [vmem:[#allocation11 + $0x170] sm:$0xff]
    %v514 = vld [vmem:[#allocation11 + $0x178] sm:$0xff]
    %v515 = vld [vmem:[#allocation11 + $0x180] sm:$0xff]
    %v516 = vld [vmem:[#allocation11 + $0x188] sm:$0xff]
    %v517 = vld [vmem:[#allocation11 + $0x190] sm:$0xff]
    %v518 = vld [vmem:[#allocation11 + $0x198] sm:$0xff]
    %v519 = vld [vmem:[#allocation11 + $0x1a0] sm:$0xff]
    %v520 = vld [vmem:[#allocation11 + $0x1a8] sm:$0xff]
    %v521 = vld [vmem:[#allocation11 + $0x1b0] sm:$0xff]
    %v522 = vld [vmem:[#allocation11 + $0x1b8] sm:$0xff]
    %v523 = vld [vmem:[#allocation11 + $0x1c0] sm:$0xff]
    %v524 = vld [vmem:[#allocation11 + $0x1c8] sm:$0xff]
    %v525 = vld [vmem:[#allocation11 + $0x1d0] sm:$0xff]
    %v526 = vld [vmem:[#allocation11 + $0x1d8] sm:$0xff]
    %v527 = vld [vmem:[#allocation11 + $0x1e0] sm:$0xff]
    %v528 = vld [vmem:[#allocation11 + $0x1e8] sm:$0xff]
    %v529 = vld [vmem:[#allocation11 + $0x1f0] sm:$0xff]
    %v530 = vld [vmem:[#allocation11 + $0x1f8] sm:$0xff]
    %v531 = vld [vmem:[%s9] sm:$0x3]
    %v533 = vlaneseq
    %v534 = vshrl.u32 %v533, 7
    %v535 = vsub.s32 0, %v534
    %v536 = vrot.slane %v466, %v535
    %v537 = vlaneseq
    %v538 = vshrl.u32 %v537, 7
    %v539 = vsub.s32 1, %v538
    %v540 = vrot.slane %v466, %v539
    %543 = vmatprep.subr.mxu0 %v403
    %544 = vmatpush1.msra.mxu0 %v402
    %545 = vmatprep.subr.mxu0 %v405
    %546 = vmatpush1.msra.mxu0 %v404
    %547 = vmatprep.subr.mxu0 %v407
    %548 = vmatpush1.msra.mxu0 %v406
    %549 = vmatprep.subr.mxu0 %v409
    %550 = vmatpush1.msra.mxu0 %v408
    %551 = vmatprep.subr.mxu0 %v411
    %552 = vmatpush1.msra.mxu0 %v410
    %553 = vmatprep.subr.mxu0 %v413
    %554 = vmatpush1.msra.mxu0 %v412
    %555 = vmatprep.subr.mxu0 %v415
    %556 = vmatpush1.msra.mxu0 %v414
    %557 = vmatprep.subr.mxu0 %v417
    %558 = vmatpush1.msra.mxu0 %v416
    %559 = vmatprep.subr.mxu0 %v419
    %560 = vmatpush1.msra.mxu0 %v418
    %561 = vmatprep.subr.mxu0 %v421
    %562 = vmatpush1.msra.mxu0 %v420
    %563 = vmatprep.subr.mxu0 %v423
    %564 = vmatpush1.msra.mxu0 %v422
    %565 = vmatprep.subr.mxu0 %v425
    %566 = vmatpush1.msra.mxu0 %v424
    %567 = vmatprep.subr.mxu0 %v427
    %568 = vmatpush1.msra.mxu0 %v426
    %569 = vmatprep.subr.mxu0 %v429
    %570 = vmatpush1.msra.mxu0 %v428
    %571 = vmatprep.subr.mxu0 %v431
    %572 = vmatpush1.msra.mxu0 %v430
    %573 = vmatprep.subr.mxu0 %v433
    %574 = vmatpush1.msra.mxu0 %v432
    %575 = vmatprep.subr.mxu0 %v435
    %576 = vmatpush1.msra.mxu0 %v434
    %577 = vmatprep.subr.mxu0 %v437
    %578 = vmatpush1.msra.mxu0 %v436
    %579 = vmatprep.subr.mxu0 %v439
    %580 = vmatpush1.msra.mxu0 %v438
    %581 = vmatprep.subr.mxu0 %v441
    %582 = vmatpush1.msra.mxu0 %v440
    %583 = vmatprep.subr.mxu0 %v443
    %584 = vmatpush1.msra.mxu0 %v442
    %585 = vmatprep.subr.mxu0 %v445
    %586 = vmatpush1.msra.mxu0 %v444
    %587 = vmatprep.subr.mxu0 %v447
    %588 = vmatpush1.msra.mxu0 %v446
    %589 = vmatprep.subr.mxu0 %v449
    %590 = vmatpush1.msra.mxu0 %v448
    %591 = vmatprep.subr.mxu0 %v451
    %592 = vmatpush1.msra.mxu0 %v450
    %593 = vmatprep.subr.mxu0 %v453
    %594 = vmatpush1.msra.mxu0 %v452
    %595 = vmatprep.subr.mxu0 %v455
    %596 = vmatpush1.msra.mxu0 %v454
    %597 = vmatprep.subr.mxu0 %v457
    %598 = vmatpush1.msra.mxu0 %v456
    %599 = vmatprep.subr.mxu0 %v459
    %600 = vmatpush1.msra.mxu0 %v458
    %601 = vmatprep.subr.mxu0 %v461
    %602 = vmatpush1.msra.mxu0 %v460
    %603 = vmatprep.subr.mxu0 %v463
    %604 = vmatpush1.msra.mxu0 %v462
    %605 = vmatprep.subr.mxu0 %v465
    %606 = vmatpush1.msra.mxu0 %v464
    %607 = vmatprep.mubr.f32.mxu0 %v399
    %608 = vmatmul.mubr.f32.gmra.mrb[0].mxu0 %v398
    %v609 = vpop.f32.mrb[0].mxu0
    %v610 = vadd.f32 %v536, %v609
    %v611 = vpop.f32.mrb[0].mxu0
    %v612 = vadd.f32 %v540, %v611
    %613 = vmatprep.mubr.f32.mxu0 %v401
    %614 = vmatmul.mubr.f32.gmra.mrb[0].mxu0 %v400
    %v615 = vpop.f32.mrb[0].mxu0
    %v616 = vadd.f32 %v536, %v615
    %v617 = vpop.f32.mrb[0].mxu0
    %v618 = vadd.f32 %v540, %v617
    %619 = vdwg.mxu0
    %v621 = vlaneseq
    %v622 = vshrl.u32 %v621, 7
    %v623 = vsub.s32 0, %v622
    %v624 = vrot.slane %v531, %v623
    %v625 = vlaneseq
    %v626 = vshrl.u32 %v625, 7
    %v627 = vsub.s32 1, %v626
    %v628 = vrot.slane %v531, %v627
    %631 = vmatprep.subr.mxu0 %v468
    %632 = vmatpush1.msra.mxu0 %v467
    %633 = vmatprep.subr.mxu0 %v470
    %634 = vmatpush1.msra.mxu0 %v469
    %635 = vmatprep.subr.mxu0 %v472
    %636 = vmatpush1.msra.mxu0 %v471
    %637 = vmatprep.subr.mxu0 %v474
    %638 = vmatpush1.msra.mxu0 %v473
    %639 = vmatprep.subr.mxu0 %v476
    %640 = vmatpush1.msra.mxu0 %v475
    %641 = vmatprep.subr.mxu0 %v478
    %642 = vmatpush1.msra.mxu0 %v477
    %643 = vmatprep.subr.mxu0 %v480
    %644 = vmatpush1.msra.mxu0 %v479
    %645 = vmatprep.subr.mxu0 %v482
    %646 = vmatpush1.msra.mxu0 %v481
    %647 = vmatprep.subr.mxu0 %v484
    %648 = vmatpush1.msra.mxu0 %v483
    %649 = vmatprep.subr.mxu0 %v486
    %650 = vmatpush1.msra.mxu0 %v485
    %651 = vmatprep.subr.mxu0 %v488
    %652 = vmatpush1.msra.mxu0 %v487
    %653 = vmatprep.subr.mxu0 %v490
    %654 = vmatpush1.msra.mxu0 %v489
    %655 = vmatprep.subr.mxu0 %v492
    %656 = vmatpush1.msra.mxu0 %v491
    %657 = vmatprep.subr.mxu0 %v494
    %658 = vmatpush1.msra.mxu0 %v493
    %659 = vmatprep.subr.mxu0 %v496
    %660 = vmatpush1.msra.mxu0 %v495
    %661 = vmatprep.subr.mxu0 %v498
    %662 = vmatpush1.msra.mxu0 %v497
    %663 = vmatprep.subr.mxu0 %v500
    %664 = vmatpush1.msra.mxu0 %v499
    %665 = vmatprep.subr.mxu0 %v502
    %666 = vmatpush1.msra.mxu0 %v501
    %667 = vmatprep.subr.mxu0 %v504
    %668 = vmatpush1.msra.mxu0 %v503
    %669 = vmatprep.subr.mxu0 %v506
    %670 = vmatpush1.msra.mxu0 %v505
    %671 = vmatprep.subr.mxu0 %v508
    %672 = vmatpush1.msra.mxu0 %v507
    %673 = vmatprep.subr.mxu0 %v510
    %674 = vmatpush1.msra.mxu0 %v509
    %675 = vmatprep.subr.mxu0 %v512
    %676 = vmatpush1.msra.mxu0 %v511
    %677 = vmatprep.subr.mxu0 %v514
    %678 = vmatpush1.msra.mxu0 %v513
    %679 = vmatprep.subr.mxu0 %v516
    %680 = vmatpush1.msra.mxu0 %v515
    %681 = vmatprep.subr.mxu0 %v518
    %682 = vmatpush1.msra.mxu0 %v517
    %683 = vmatprep.subr.mxu0 %v520
    %684 = vmatpush1.msra.mxu0 %v519
    %685 = vmatprep.subr.mxu0 %v522
    %686 = vmatpush1.msra.mxu0 %v521
    %687 = vmatprep.subr.mxu0 %v524
    %688 = vmatpush1.msra.mxu0 %v523
    %689 = vmatprep.subr.mxu0 %v526
    %690 = vmatpush1.msra.mxu0 %v525
    %691 = vmatprep.subr.mxu0 %v528
    %692 = vmatpush1.msra.mxu0 %v527
    %693 = vmatprep.subr.mxu0 %v530
    %694 = vmatpush1.msra.mxu0 %v529
    %695 = vmatprep.mubr.f32.mxu0 %v399
    %696 = vmatmul.mubr.f32.gmra.mrb[0].mxu0 %v398
    %v697 = vpop.f32.mrb[0].mxu0
    %v698 = vadd.f32 %v624, %v697
    %v699 = vpop.f32.mrb[0].mxu0
    %v700 = vadd.f32 %v628, %v699
    %701 = vmatprep.mubr.f32.mxu0 %v401
    %702 = vmatmul.mubr.f32.gmra.mrb[0].mxu0 %v400
    %v703 = vpop.f32.mrb[0].mxu0
    %v704 = vadd.f32 %v624, %v703
    %v705 = vpop.f32.mrb[0].mxu0
    %v706 = vadd.f32 %v628, %v705
    %707 = vdwg.mxu0
    %v708 = vmul.f32 %v610, 0.5
    %v709 = vmul.f32 %v612, 0.5
    %v710 = vmul.f32 %v616, 0.5
    %v711 = vmul.f32 %v618, 0.5
    %v712 = vtanh.pop %v708
    %v713 = vtanh.pop %v709
    %v714 = vtanh.pop %v710
    %v715 = vtanh.pop %v711
    %v716 = vmul.f32 %v712, 0.5
    %v717 = vmul.f32 %v713, 0.5
    %v718 = vmul.f32 %v714, 0.5
    %v719 = vmul.f32 %v715, 0.5
    %v720 = vadd.f32 %v716, 0.5
    %v721 = vadd.f32 %v717, 0.5
    %v722 = vadd.f32 %v718, 0.5
    %v723 = vadd.f32 %v719, 0.5
    %v724 = vld [vmem:[#allocation5] sm:$0xff]
    %v725 = vld [vmem:[#allocation5 + $0x8] sm:$0xff]
    %v726 = vld [vmem:[#allocation5 + $0x10] sm:$0xff]
    %v727 = vld [vmem:[#allocation5 + $0x18] sm:$0xff]
    %v728 = vmul.f32 %v720, %v724
    %v729 = vmul.f32 %v721, %v725
    %v730 = vmul.f32 %v722, %v726
    %v731 = vmul.f32 %v723, %v727
    %v732 = vadd.f32 %v728, %v698
    %v733 = vadd.f32 %v729, %v700
    %v734 = vadd.f32 %v730, %v704
    %v735 = vadd.f32 %v731, %v706
    %736 = vst [vmem:[#allocation13] sm:$0xff] %v732
    %737 = vst [vmem:[#allocation13 + $0x8] sm:$0xff] %v733
    %738 = vst [vmem:[#allocation13 + $0x10] sm:$0xff] %v734
    %739 = vst [vmem:[#allocation13 + $0x18] sm:$0xff] %v735
    // Predicated region
    $region66: #{tpu_custom_call.1} parent=1 // pred_check
      _
    $region67: #{tpu_custom_call.1} parent=1 // pred_check_branch
      %741 = sbr.rel (0) target = $region69
    $region68: #{tpu_custom_call.1} parent=1 // pred_region
      %s743 = ssub.s32 512, 512
      %744 = vsyncadd [#allocation4], %s743
      %s745 = sshll.u32 [#allocation13], 4
      %s746 = int_to_ptr.vmem [resolvable:$true] %s745
      %751 = dma.vmem_to_hbm [thread:$0]  %s746, 512, %s10, [#allocation4], 256, 256, 16
    $region69: #{tpu_custom_call.1} parent=1 // pred_fallthru
      _
    // Predicated region
    $region70: #{tpu_custom_call.1} parent=1 // pred_check
      _
    $region71: #{tpu_custom_call.1} parent=1 // pred_check_branch
      %753 = sbr.rel (0) target = $region73
    $region72: #{tpu_custom_call.1} parent=1 // pred_region
      %754 = dma.done [#allocation4], 512
    $region73: #{tpu_custom_call.1} parent=1 // pred_fallthru
      _
    %755 = vsyncpa [#allocation3], 1
    %756 = vsyncpa [#allocation6], 1
    %757 = vsyncpa [#allocation9], 1
    %758 = vsyncpa [#allocation12], 1
    %759 = vsyncpa [#allocation4], 1

</llo_original>
